<compile_context>
chip_gen: v6e
topology: v6e:2x2x1
jax: 0.10.0
libtpu: 0.0.40
codegen_flags: <defaults>
</compile_context>

<pallas_src>
import jax
import jax.numpy as jnp
import numpy as np
from jax.experimental import pallas as pl
from jax.experimental.pallas import tpu as pltpu


HIDDEN = 64  # fixed by the module: nn.Linear(num_features, 64)


def _round_up(x, m):
    return (x + m - 1) // m * m


# ----------------------------------------------------------------------------
# Pallas kernel: one batch tile, all `out_dim` heads fused.
#   x_ref  : (TILE_N, F)   f32    streamed per grid step (cast to bf16 here)
#   w1t_ref: (D*64, F)     bf16   resident (per-head (64, F) stacked on rows)
#   b1_ref : (D*64, 1)     f32    resident
#   w2_ref : (D, 64, 1)    f32    resident (dense per-head 2nd-layer weights)
#   b2_ref : (D, 1)        f32    resident
#   ot_ref : (D, TILE_N)   f32    lane-dense output block (transposed)
# ----------------------------------------------------------------------------
def mlp_heads_kernel(x_ref, w1t_ref, b1_ref, w2_ref, b2_ref, ot_ref):
    # bf16 only for the MXU; cast is a handful of VPU ops per tile.
    x_bf = x_ref[...].astype(jnp.bfloat16)

    # Layer 1, all heads at once on the MXU: (D*64, F) contracted with
    # (TILE_N, F) over F  ->  (D*64, TILE_N), f32 accumulation.
    h = jnp.einsum("hf,nf->hn", w1t_ref[...], x_bf,
                   preferred_element_type=jnp.float32)
    h = jnp.maximum(h + b1_ref[...], 0.0)                 # bias + ReLU in f32

    # Layer 2, per-head contraction of the 64-wide hidden axis (VPU + sublane
    # reduce; sublane-only regroup of the (D*64, TILE_N) block).
    d, hidden, _ = w2_ref.shape
    tile_n = h.shape[-1]
    h3 = h.reshape(d, hidden, tile_n)
    ot = jnp.sum(h3 * w2_ref[...], axis=1)                # (D, TILE_N) f32
    ot_ref[...] = (ot + b2_ref[...]).astype(ot_ref.dtype)


# ----------------------------------------------------------------------------
# Wrapper: tiling, padding, dtype handling, pallas_call.
# ----------------------------------------------------------------------------
def mlp_layer_forward(x, w1t, b1, w2, b2, *, tile_n=1024):
    """x: (N, F).  w1t: (D*64, F).  b1: (D*64,).  w2: (D, 64).  b2: (D,)."""
    N, F = x.shape
    H = w1t.shape[0]
    D = w2.shape[0]
    assert H == D * HIDDEN

    # Batch tile: multiple of 128 when tiling is needed (lane-dense output
    # stores, v5e 128-wide MXU), otherwise one sublane-aligned tile.
    if N <= tile_n:
        tile_n = max(_round_up(N, 8), 8)
    else:
        tile_n = _round_up(tile_n, 128)
    n_pad = _round_up(N, tile_n)
    x_p = jnp.pad(x, ((0, n_pad - N), (0, 0))) if n_pad != N else x
    num_tiles = n_pad // tile_n

    # Weights: bf16 only for the MXU operand; everything elementwise f32.
    w1t_bf = w1t.astype(jnp.bfloat16)
    b1_c = b1.reshape(H, 1).astype(jnp.float32)
    w2_c = w2.reshape(D, HIDDEN, 1).astype(jnp.float32)
    b2_c = b2.reshape(D, 1).astype(jnp.float32)

    # VMEM budget: double-buffered x/out tiles + resident weights + f32
    # intermediates, with 2x headroom, capped below v7x's 64 MiB.
    tile_bytes = (2 * (tile_n * F * 4 + D * tile_n * 4)
                  + H * F * 2 + H * 4 + D * HIDDEN * 4 + D * 4
                  + 3 * H * tile_n * 4)
    vmem_limit = int(min(max(2 * tile_bytes, 4 << 20), 48 << 20))

    cost = pl.CostEstimate(
        flops=int(2 * n_pad * F * H + 3 * n_pad * H),
        transcendentals=0,
        bytes_accessed=int(n_pad * F * 4 + w1t_bf.size * 2
                           + (b1_c.size + w2_c.size + b2_c.size) * 4
                           + D * n_pad * 4),
    )

    out_t = pl.pallas_call(
        mlp_heads_kernel,
        out_shape=jax.ShapeDtypeStruct((D, n_pad), jnp.float32),
        grid_spec=pltpu.PrefetchScalarGridSpec(
            num_scalar_prefetch=0,
            grid=(num_tiles,),
            in_specs=[
                pl.BlockSpec((tile_n, F), lambda i: (i, 0)),        # x streamed
                pl.BlockSpec((H, F), lambda i: (0, 0)),             # resident
                pl.BlockSpec((H, 1), lambda i: (0, 0)),             # resident
                pl.BlockSpec((D, HIDDEN, 1), lambda i: (0, 0, 0)),  # resident
                pl.BlockSpec((D, 1), lambda i: (0, 0)),             # resident
            ],
            out_specs=pl.BlockSpec((D, tile_n), lambda i: (0, i)),
        ),
        compiler_params=pltpu.CompilerParams(
            dimension_semantics=("parallel",),   # 2 TCs on v7x share the grid
            vmem_limit_bytes=vmem_limit),
        cost_estimate=cost,
    )(x_p, w1t_bf, b1_c, w2_c, b2_c)

    # (D, N_pad) -> (N, D), dropping the batch padding.
    return out_t[:, :N].T.astype(x.dtype)


# ----------------------------------------------------------------------------
# Parameter construction (deterministic, mimics nn.Linear default init).
# ----------------------------------------------------------------------------
def init_mlp_heads(key, num_features, out_dim, dtype=jnp.float32):
    keys = jax.random.split(key, out_dim * 4).reshape(out_dim, 4, 2)
    bound1 = 1.0 / np.sqrt(num_features)
    bound2 = 1.0 / np.sqrt(HIDDEN)
    w1_list, b1_list, w2_list, b2_list = [], [], [], []
    for d in range(out_dim):
        k_w1, k_b1, k_w2, k_b2 = keys[d]
        # (in, out) layout so that reference uses x @ w1.
        w1_list.append(jax.random.uniform(k_w1, (num_features, HIDDEN), dtype,
                                          minval=-bound1, maxval=bound1))
        b1_list.append(jax.random.uniform(k_b1, (HIDDEN,), dtype,
                                          minval=-bound1, maxval=bound1))
        w2_list.append(jax.random.uniform(k_w2, (HIDDEN,), dtype,
                                          minval=-bound2, maxval=bound2))
        b2_list.append(jax.random.uniform(k_b2, (1,), dtype,
                                          minval=-bound2, maxval=bound2))

    # Packed layouts for the kernel.
    w1t = jnp.concatenate([w.T for w in w1_list], axis=0)   # (D*64, F)
    b1 = jnp.concatenate(b1_list, axis=0)                   # (D*64,)
    w2 = jnp.stack(w2_list, axis=0)                         # (D, 64)
    b2 = jnp.concatenate(b2_list, axis=0)                   # (D,)
    return (w1t, b1, w2, b2), (w1_list, b1_list, w2_list, b2_list)


def reference_forward(x, per_head):
    w1_list, b1_list, w2_list, b2_list = per_head
    outs = []
    for w1, b1, w2, b2 in zip(w1_list, b1_list, w2_list, b2_list):
        h = jnp.maximum(x @ w1 + b1, 0.0)
        outs.append(h @ w2[:, None] + b2)                    # (N, 1)
    return jnp.concatenate(outs, axis=1)                     # (N, D)


if __name__ == "__main__":
    # Small, module-consistent shapes: N=8 feature vectors of dim F=32,
    # out_dim=4 heads (hidden width 64 fixed by the module).
    N, num_features, out_dim = 8, 32, 4

    key = jax.random.PRNGKey(0)
    k_x, k_p, k_x2 = jax.random.split(key, 3)
    x = jax.random.normal(k_x, (N, num_features), jnp.float32)

    (w1t, b1, w2, b2), per_head = init_mlp_heads(k_p, num_features, out_dim)

    out = jax.block_until_ready(mlp_layer_forward(x, w1t, b1, w2, b2))
    ref = reference_forward(x, per_head)
    # bf16 MXU inputs -> relaxed tolerance vs the f32 reference.
    np.testing.assert_allclose(np.asarray(out), np.asarray(ref),
                               rtol=2e-2, atol=2e-2)

    # Also exercise the multi-tile (grid > 1) + batch-padding path, under jit
    # so pad / slice / transpose fuse with surrounding XLA ops.
    x_big = jax.random.normal(k_x2, (300, num_features), jnp.float32)
    fwd_big = jax.jit(
        lambda xx: mlp_layer_forward(xx, w1t, b1, w2, b2, tile_n=128))
    out_big = jax.block_until_ready(fwd_big(x_big))
    ref_big = reference_forward(x_big, per_head)
    np.testing.assert_allclose(np.asarray(out_big), np.asarray(ref_big),
                               rtol=2e-2, atol=2e-2)

    print("KERNEL_OK")
</pallas_src>

<mosaic_0001>
module attributes {stable_mosaic.version = 11 : i64} {
  func.func @mlp_heads_kernel(%arg0: i32, %arg1: memref<8x32xf32, #tpu.memory_space<vmem>>, %arg2: memref<256x32xbf16, #tpu.memory_space<vmem>>, %arg3: memref<256x1xf32, #tpu.memory_space<vmem>>, %arg4: memref<4x64x1xf32, #tpu.memory_space<vmem>>, %arg5: memref<4x1xf32, #tpu.memory_space<vmem>>, %arg6: memref<4x8xf32, #tpu.memory_space<vmem>>) attributes {dimension_semantics = [#tpu.dimension_semantics<parallel>], iteration_bounds = array<i64: 1>, scalar_prefetch = 0 : i64, scratch_operands = 0 : i64, tpu.core_type = #tpu.core_type<tc>, window_params = [{transform_indices = @transform_0, window_bounds = array<i64: 8, 32>}, {pipeline_mode = #tpu.pipeline_mode<synchronous>, transform_indices = @transform_1, window_bounds = array<i64: 256, 32>}, {pipeline_mode = #tpu.pipeline_mode<synchronous>, transform_indices = @transform_2, window_bounds = array<i64: 256, 1>}, {pipeline_mode = #tpu.pipeline_mode<synchronous>, transform_indices = @transform_3, window_bounds = array<i64: 4, 64, 1>}, {pipeline_mode = #tpu.pipeline_mode<synchronous>, transform_indices = @transform_4, window_bounds = array<i64: 4, 1>}, {transform_indices = @transform_5, window_bounds = array<i64: 4, 8>}]} {
    %c0 = arith.constant 0 : index
    %c0_0 = arith.constant 0 : index
    %0 = vector.load %arg1[%c0, %c0_0] : memref<8x32xf32, #tpu.memory_space<vmem>>, vector<8x32xf32>
    %1 = arith.truncf %0 : vector<8x32xf32> to vector<8x32xbf16>
    %c0_1 = arith.constant 0 : index
    %c0_2 = arith.constant 0 : index
    %2 = vector.load %arg2[%c0_1, %c0_2] : memref<256x32xbf16, #tpu.memory_space<vmem>>, vector<256x32xbf16>
    "tpu.trace_start"() <{level = 10 : i32, message = "hf,nf->hn"}> : () -> ()
    %cst = arith.constant dense<0.000000e+00> : vector<256x8xf32>
    %3 = tpu.matmul %2, %1, %cst {dimension_numbers = #tpu.dot_dimension_numbers<[1], [1], [0], [0], [0, 0, 1, 0], [], []>} : vector<256x32xbf16>, vector<8x32xbf16>, vector<256x8xf32> -> vector<256x8xf32>
    "tpu.trace_stop"() : () -> ()
    %c0_3 = arith.constant 0 : index
    %c0_4 = arith.constant 0 : index
    %4 = vector.load %arg3[%c0_3, %c0_4] : memref<256x1xf32, #tpu.memory_space<vmem>>, vector<256x1xf32>
    %5 = vector.broadcast %4 : vector<256x1xf32> to vector<256x8xf32>
    %6 = arith.addf %3, %5 : vector<256x8xf32>
    %cst_5 = arith.constant 0.000000e+00 : f32
    %7 = vector.broadcast %cst_5 : f32 to vector<256x8xf32>
    %8 = arith.maximumf %6, %7 : vector<256x8xf32>
    %9 = vector.shape_cast %8 : vector<256x8xf32> to vector<4x64x8xf32>
    %c0_6 = arith.constant 0 : index
    %c0_7 = arith.constant 0 : index
    %c0_8 = arith.constant 0 : index
    %10 = vector.load %arg4[%c0_6, %c0_7, %c0_8] : memref<4x64x1xf32, #tpu.memory_space<vmem>>, vector<4x64x1xf32>
    %11 = vector.broadcast %10 : vector<4x64x1xf32> to vector<4x64x8xf32>
    %12 = arith.mulf %9, %11 : vector<4x64x8xf32>
    %cst_9 = arith.constant dense<0.000000e+00> : vector<4x8xf32>
    %13 = vector.multi_reduction <add>, %12, %cst_9 [1] : vector<4x64x8xf32> to vector<4x8xf32>
    %c0_10 = arith.constant 0 : index
    %c0_11 = arith.constant 0 : index
    %14 = vector.load %arg5[%c0_10, %c0_11] : memref<4x1xf32, #tpu.memory_space<vmem>>, vector<4x1xf32>
    %15 = vector.broadcast %14 : vector<4x1xf32> to vector<4x8xf32>
    %16 = arith.addf %13, %15 : vector<4x8xf32>
    %c0_12 = arith.constant 0 : index
    %c0_13 = arith.constant 0 : index
    %17 = vector.load %arg6[%c0_12, %c0_13] : memref<4x8xf32, #tpu.memory_space<vmem>>, vector<4x8xf32>
    tpu.vector_store %arg6[%c0_12, %c0_13], %16 {strides = array<i32>} : memref<4x8xf32, #tpu.memory_space<vmem>>, vector<4x8xf32>,
    return
  }
  func.func @transform_0(%arg0: i32) -> (i32, i32) {
    %c0_i32 = arith.constant 0 : i32
    %c0_i32_0 = arith.constant 0 : i32
    return %arg0, %c0_i32 : i32, i32
  }
  func.func @transform_1(%arg0: i32) -> (i32, i32) {
    %c0_i32 = arith.constant 0 : i32
    %c0_i32_0 = arith.constant 0 : i32
    %c0_i32_1 = arith.constant 0 : i32
    return %c0_i32, %c0_i32_0 : i32, i32
  }
  func.func @transform_2(%arg0: i32) -> (i32, i32) {
    %c0_i32 = arith.constant 0 : i32
    %c0_i32_0 = arith.constant 0 : i32
    %c0_i32_1 = arith.constant 0 : i32
    return %c0_i32, %c0_i32_0 : i32, i32
  }
  func.func @transform_3(%arg0: i32) -> (i32, i32, i32) {
    %c0_i32 = arith.constant 0 : i32
    %c0_i32_0 = arith.constant 0 : i32
    %c0_i32_1 = arith.constant 0 : i32
    %c0_i32_2 = arith.constant 0 : i32
    return %c0_i32, %c0_i32_0, %c0_i32_1 : i32, i32, i32
  }
  func.func @transform_4(%arg0: i32) -> (i32, i32) {
    %c0_i32 = arith.constant 0 : i32
    %c0_i32_0 = arith.constant 0 : i32
    %c0_i32_1 = arith.constant 0 : i32
    return %c0_i32, %c0_i32_0 : i32, i32
  }
  func.func @transform_5(%arg0: i32) -> (i32, i32) {
    %c0_i32 = arith.constant 0 : i32
    %c0_i32_0 = arith.constant 0 : i32
    return %c0_i32, %arg0 : i32, i32
  }
}

</mosaic_0001>

<llo_original>
// kernel: tpu_custom_call.1
$region0: #{tpu_custom_call.1}
  #allocation0 [shape = 'u32[]', space=smem, size = 0x4, offset = 0x4, fixed_abs, tag = 'smem constant byte address 0x4 - core index']
  #allocation1 [shape = 'u32[144,128]{1,0:T(1,128)}', space=vmem, size = 0x12000, scoped, tag = 'internal scratch']
  %s0 = inlined_call_operand.vmem [shape: f32[8,32], index: 0, kind: input, shape index: {}]
  %s1 = inlined_call_operand.vmem [shape: bf16[256,32], index: 1, kind: input, shape index: {}]
  %s2 = inlined_call_operand.vmem [shape: f32[256,1], index: 2, kind: input, shape index: {}]
  %s3 = inlined_call_operand.vmem [shape: f32[4,64,1], index: 3, kind: input, shape index: {}]
  %s4 = inlined_call_operand.vmem [shape: f32[4,1], index: 4, kind: input, shape index: {}]
  %s5 = inlined_call_operand.hbm [shape: f32[4,8], index: 5, kind: output, shape index: {}]
  %s6 = sld [smem:[#allocation0]]
  $region30: #{tpu_custom_call.1} parent=0
    _
  %s8 = ssub.s32 1, %s6
  %s9 = scalar_select 0, %s8, %s6
  $region1: #{tpu_custom_call.1} parent=0
    #allocation2 [shape = 'u8[2048]{0}', space=vmem, size = 0x800, scoped, tag = 'output window, operand 0, single buffered']
    #allocation3 [shape = 's32[1]{0}', space=sflag, size = 0x4, scoped, tag = 'scoped memory for tpu_custom_call.1']
    %10 = vsyncpa [#allocation3], 0
    // Predicated region
    $region2: #{tpu_custom_call.1} parent=1 // pred_check
      _
    $region3: #{tpu_custom_call.1} parent=1 // pred_check_branch
      %12 = sbr.rel (0) target = $region5
    $region4: #{tpu_custom_call.1} parent=1 // pred_region
      _
    $region5: #{tpu_custom_call.1} parent=1 // pred_fallthru
      _
    // Predicated region
    $region6: #{tpu_custom_call.1} parent=1 // pred_check
      _
    $region7: #{tpu_custom_call.1} parent=1 // pred_check_branch
      %14 = sbr.rel (0) target = $region9
    $region8: #{tpu_custom_call.1} parent=1 // pred_region
      _
    $region9: #{tpu_custom_call.1} parent=1 // pred_fallthru
      _
    // Predicated region
    $region10: #{tpu_custom_call.1} parent=1 // pred_check
      _
    $region11: #{tpu_custom_call.1} parent=1 // pred_check_branch
      %16 = sbr.rel (0) target = $region13
    $region12: #{tpu_custom_call.1} parent=1 // pred_region
      _
    $region13: #{tpu_custom_call.1} parent=1 // pred_fallthru
      _
    // Predicated region
    $region14: #{tpu_custom_call.1} parent=1 // pred_check
      _
    $region15: #{tpu_custom_call.1} parent=1 // pred_check_branch
      %18 = sbr.rel (0) target = $region17
    $region16: #{tpu_custom_call.1} parent=1 // pred_region
      _
    $region17: #{tpu_custom_call.1} parent=1 // pred_fallthru
      _
    // Predicated region
    $region18: #{tpu_custom_call.1} parent=1 // pred_check
      _
    $region19: #{tpu_custom_call.1} parent=1 // pred_check_branch
      %20 = sbr.rel (0) target = $region21
    $region20: #{tpu_custom_call.1} parent=1 // pred_region
      _
    $region21: #{tpu_custom_call.1} parent=1 // pred_fallthru
      _
    %v22 = vld [vmem:[%s0] sm:$0xff]
    %v23 = vpack.c.bf16 %v22, %v22
    %v24 = vld [vmem:[%s1] sm:$0xf]
    %v25 = vld [vmem:[%s1 + $0x4] sm:$0xf]
    %v26 = vld [vmem:[%s1 + $0x8] sm:$0xf]
    %v27 = vld [vmem:[%s1 + $0xc] sm:$0xf]
    %v28 = vld [vmem:[%s1 + $0x10] sm:$0xf]
    %v29 = vld [vmem:[%s1 + $0x14] sm:$0xf]
    %v30 = vld [vmem:[%s1 + $0x18] sm:$0xf]
    %v31 = vld [vmem:[%s1 + $0x1c] sm:$0xf]
    %v32 = vld [vmem:[%s1 + $0x20] sm:$0xf]
    %v33 = vld [vmem:[%s1 + $0x24] sm:$0xf]
    %v34 = vld [vmem:[%s1 + $0x28] sm:$0xf]
    %v35 = vld [vmem:[%s1 + $0x2c] sm:$0xf]
    %v36 = vld [vmem:[%s1 + $0x30] sm:$0xf]
    %v37 = vld [vmem:[%s1 + $0x34] sm:$0xf]
    %v38 = vld [vmem:[%s1 + $0x38] sm:$0xf]
    %v39 = vld [vmem:[%s1 + $0x3c] sm:$0xf]
    %v40 = vld [vmem:[%s1 + $0x40] sm:$0xf]
    %v41 = vld [vmem:[%s1 + $0x44] sm:$0xf]
    %v42 = vld [vmem:[%s1 + $0x48] sm:$0xf]
    %v43 = vld [vmem:[%s1 + $0x4c] sm:$0xf]
    %v44 = vld [vmem:[%s1 + $0x50] sm:$0xf]
    %v45 = vld [vmem:[%s1 + $0x54] sm:$0xf]
    %v46 = vld [vmem:[%s1 + $0x58] sm:$0xf]
    %v47 = vld [vmem:[%s1 + $0x5c] sm:$0xf]
    %v48 = vld [vmem:[%s1 + $0x60] sm:$0xf]
    %v49 = vld [vmem:[%s1 + $0x64] sm:$0xf]
    %v50 = vld [vmem:[%s1 + $0x68] sm:$0xf]
    %v51 = vld [vmem:[%s1 + $0x6c] sm:$0xf]
    %v52 = vld [vmem:[%s1 + $0x70] sm:$0xf]
    %v53 = vld [vmem:[%s1 + $0x74] sm:$0xf]
    %v54 = vld [vmem:[%s1 + $0x78] sm:$0xf]
    %v55 = vld [vmem:[%s1 + $0x7c] sm:$0xf]
    %v56 = vld [vmem:[%s2] sm:$0xff]
    %v57 = vld [vmem:[%s2 + $0x8] sm:$0xff]
    %v58 = vld [vmem:[%s2 + $0x10] sm:$0xff]
    %v59 = vld [vmem:[%s2 + $0x18] sm:$0xff]
    %v60 = vld [vmem:[%s2 + $0x20] sm:$0xff]
    %v61 = vld [vmem:[%s2 + $0x28] sm:$0xff]
    %v62 = vld [vmem:[%s2 + $0x30] sm:$0xff]
    %v63 = vld [vmem:[%s2 + $0x38] sm:$0xff]
    %v64 = vld [vmem:[%s2 + $0x40] sm:$0xff]
    %v65 = vld [vmem:[%s2 + $0x48] sm:$0xff]
    %v66 = vld [vmem:[%s2 + $0x50] sm:$0xff]
    %v67 = vld [vmem:[%s2 + $0x58] sm:$0xff]
    %v68 = vld [vmem:[%s2 + $0x60] sm:$0xff]
    %v69 = vld [vmem:[%s2 + $0x68] sm:$0xff]
    %v70 = vld [vmem:[%s2 + $0x70] sm:$0xff]
    %v71 = vld [vmem:[%s2 + $0x78] sm:$0xff]
    %v72 = vld [vmem:[%s2 + $0x80] sm:$0xff]
    %v73 = vld [vmem:[%s2 + $0x88] sm:$0xff]
    %v74 = vld [vmem:[%s2 + $0x90] sm:$0xff]
    %v75 = vld [vmem:[%s2 + $0x98] sm:$0xff]
    %v76 = vld [vmem:[%s2 + $0xa0] sm:$0xff]
    %v77 = vld [vmem:[%s2 + $0xa8] sm:$0xff]
    %v78 = vld [vmem:[%s2 + $0xb0] sm:$0xff]
    %v79 = vld [vmem:[%s2 + $0xb8] sm:$0xff]
    %v80 = vld [vmem:[%s2 + $0xc0] sm:$0xff]
    %v81 = vld [vmem:[%s2 + $0xc8] sm:$0xff]
    %v82 = vld [vmem:[%s2 + $0xd0] sm:$0xff]
    %v83 = vld [vmem:[%s2 + $0xd8] sm:$0xff]
    %v84 = vld [vmem:[%s2 + $0xe0] sm:$0xff]
    %v85 = vld [vmem:[%s2 + $0xe8] sm:$0xff]
    %v86 = vld [vmem:[%s2 + $0xf0] sm:$0xff]
    %v87 = vld [vmem:[%s2 + $0xf8] sm:$0xff]
    %89 = vset.pattern.permute.xlu0 0
    %90 = vperm.xlu0 %89, %v56
    %v91 = vpop.permute.xlu0 %90
    %94 = vset.pattern.permute.xlu0 0
    %95 = vperm.xlu0 %94, %v57
    %v96 = vpop.permute.xlu0 %95
    %99 = vset.pattern.permute.xlu0 0
    %100 = vperm.xlu0 %99, %v58
    %v101 = vpop.permute.xlu0 %100
    %104 = vset.pattern.permute.xlu0 0
    %105 = vperm.xlu0 %104, %v59
    %v106 = vpop.permute.xlu0 %105
    %109 = vset.pattern.permute.xlu0 0
    %110 = vperm.xlu0 %109, %v60
    %v111 = vpop.permute.xlu0 %110
    %114 = vset.pattern.permute.xlu0 0
    %115 = vperm.xlu0 %114, %v61
    %v116 = vpop.permute.xlu0 %115
    %119 = vset.pattern.permute.xlu0 0
    %120 = vperm.xlu0 %119, %v62
    %v121 = vpop.permute.xlu0 %120
    %124 = vset.pattern.permute.xlu0 0
    %125 = vperm.xlu0 %124, %v63
    %v126 = vpop.permute.xlu0 %125
    %129 = vset.pattern.permute.xlu0 0
    %130 = vperm.xlu0 %129, %v64
    %v131 = vpop.permute.xlu0 %130
    %134 = vset.pattern.permute.xlu0 0
    %135 = vperm.xlu0 %134, %v65
    %v136 = vpop.permute.xlu0 %135
    %139 = vset.pattern.permute.xlu0 0
    %140 = vperm.xlu0 %139, %v66
    %v141 = vpop.permute.xlu0 %140
    %144 = vset.pattern.permute.xlu0 0
    %145 = vperm.xlu0 %144, %v67
    %v146 = vpop.permute.xlu0 %145
    %149 = vset.pattern.permute.xlu0 0
    %150 = vperm.xlu0 %149, %v68
    %v151 = vpop.permute.xlu0 %150
    %154 = vset.pattern.permute.xlu0 0
    %155 = vperm.xlu0 %154, %v69
    %v156 = vpop.permute.xlu0 %155
    %159 = vset.pattern.permute.xlu0 0
    %160 = vperm.xlu0 %159, %v70
    %v161 = vpop.permute.xlu0 %160
    %164 = vset.pattern.permute.xlu0 0
    %165 = vperm.xlu0 %164, %v71
    %v166 = vpop.permute.xlu0 %165
    %169 = vset.pattern.permute.xlu0 0
    %170 = vperm.xlu0 %169, %v72
    %v171 = vpop.permute.xlu0 %170
    %174 = vset.pattern.permute.xlu0 0
    %175 = vperm.xlu0 %174, %v73
    %v176 = vpop.permute.xlu0 %175
    %179 = vset.pattern.permute.xlu0 0
    %180 = vperm.xlu0 %179, %v74
    %v181 = vpop.permute.xlu0 %180
    %184 = vset.pattern.permute.xlu0 0
    %185 = vperm.xlu0 %184, %v75
    %v186 = vpop.permute.xlu0 %185
    %189 = vset.pattern.permute.xlu0 0
    %190 = vperm.xlu0 %189, %v76
    %v191 = vpop.permute.xlu0 %190
    %194 = vset.pattern.permute.xlu0 0
    %195 = vperm.xlu0 %194, %v77
    %v196 = vpop.permute.xlu0 %195
    %199 = vset.pattern.permute.xlu0 0
    %200 = vperm.xlu0 %199, %v78
    %v201 = vpop.permute.xlu0 %200
    %204 = vset.pattern.permute.xlu0 0
    %205 = vperm.xlu0 %204, %v79
    %v206 = vpop.permute.xlu0 %205
    %209 = vset.pattern.permute.xlu0 0
    %210 = vperm.xlu0 %209, %v80
    %v211 = vpop.permute.xlu0 %210
    %214 = vset.pattern.permute.xlu0 0
    %215 = vperm.xlu0 %214, %v81
    %v216 = vpop.permute.xlu0 %215
    %219 = vset.pattern.permute.xlu0 0
    %220 = vperm.xlu0 %219, %v82
    %v221 = vpop.permute.xlu0 %220
    %224 = vset.pattern.permute.xlu0 0
    %225 = vperm.xlu0 %224, %v83
    %v226 = vpop.permute.xlu0 %225
    %229 = vset.pattern.permute.xlu0 0
    %230 = vperm.xlu0 %229, %v84
    %v231 = vpop.permute.xlu0 %230
    %234 = vset.pattern.permute.xlu0 0
    %235 = vperm.xlu0 %234, %v85
    %v236 = vpop.permute.xlu0 %235
    %239 = vset.pattern.permute.xlu0 0
    %240 = vperm.xlu0 %239, %v86
    %v241 = vpop.permute.xlu0 %240
    %244 = vset.pattern.permute.xlu0 0
    %245 = vperm.xlu0 %244, %v87
    %v246 = vpop.permute.xlu0 %245
    %v280 = vunpack.c.l.b16 %v24
    %v281 = vunpack.c.l.b16 %v25
    %v282 = vunpack.c.l.b16 %v26
    %v283 = vunpack.c.l.b16 %v27
    %v284 = vunpack.c.l.b16 %v28
    %v285 = vunpack.c.l.b16 %v29
    %v286 = vunpack.c.l.b16 %v30
    %v287 = vunpack.c.l.b16 %v31
    %v288 = vunpack.c.l.b16 %v32
    %v289 = vunpack.c.l.b16 %v33
    %v290 = vunpack.c.l.b16 %v34
    %v291 = vunpack.c.l.b16 %v35
    %v292 = vunpack.c.l.b16 %v36
    %v293 = vunpack.c.l.b16 %v37
    %v294 = vunpack.c.l.b16 %v38
    %v295 = vunpack.c.l.b16 %v39
    %v296 = vunpack.c.l.b16 %v40
    %v297 = vunpack.c.l.b16 %v41
    %v298 = vunpack.c.l.b16 %v42
    %v299 = vunpack.c.l.b16 %v43
    %v300 = vunpack.c.l.b16 %v44
    %v301 = vunpack.c.l.b16 %v45
    %v302 = vunpack.c.l.b16 %v46
    %v303 = vunpack.c.l.b16 %v47
    %v304 = vunpack.c.l.b16 %v48
    %v305 = vunpack.c.l.b16 %v49
    %v306 = vunpack.c.l.b16 %v50
    %v307 = vunpack.c.l.b16 %v51
    %v308 = vunpack.c.l.b16 %v52
    %v309 = vunpack.c.l.b16 %v53
    %v310 = vunpack.c.l.b16 %v54
    %v311 = vunpack.c.l.b16 %v55
    %v312 = vpack.c.b16 %v281, %v280
    %v313 = vpack.c.b16 %v283, %v282
    %v314 = vpack.c.b16 %v285, %v284
    %v315 = vpack.c.b16 %v287, %v286
    %v316 = vpack.c.b16 %v289, %v288
    %v317 = vpack.c.b16 %v291, %v290
    %v318 = vpack.c.b16 %v293, %v292
    %v319 = vpack.c.b16 %v295, %v294
    %v320 = vpack.c.b16 %v297, %v296
    %v321 = vpack.c.b16 %v299, %v298
    %v322 = vpack.c.b16 %v301, %v300
    %v323 = vpack.c.b16 %v303, %v302
    %v324 = vpack.c.b16 %v305, %v304
    %v325 = vpack.c.b16 %v307, %v306
    %v326 = vpack.c.b16 %v309, %v308
    %v327 = vpack.c.b16 %v311, %v310
    %vm328 = vcmask 261120
    %v330 = vsel %vm328, %v312, 0
    %v333 = vsel %vm328, %v313, 0
    %v336 = vsel %vm328, %v314, 0
    %v339 = vsel %vm328, %v315, 0
    %v342 = vsel %vm328, %v316, 0
    %v345 = vsel %vm328, %v317, 0
    %v348 = vsel %vm328, %v318, 0
    %v351 = vsel %vm328, %v319, 0
    %v354 = vsel %vm328, %v320, 0
    %v357 = vsel %vm328, %v321, 0
    %v360 = vsel %vm328, %v322, 0
    %v363 = vsel %vm328, %v323, 0
    %v366 = vsel %vm328, %v324, 0
    %v369 = vsel %vm328, %v325, 0
    %v372 = vsel %vm328, %v326, 0
    %v375 = vsel %vm328, %v327, 0
    %v378 = vsel %vm328, %v23, 0
    %380 = vmatprep.subr.bf16.mxu0 0
    %381 = vmatpush1.bf16.xpose.msra.mxu0 0
    %382 = vmatprep.subr.bf16.mxu0 0
    %383 = vmatpush1.bf16.xpose.msra.mxu0 0
    %384 = vmatprep.subr.bf16.mxu0 0
    %385 = vmatpush1.bf16.xpose.msra.mxu0 0
    %386 = vmatprep.subr.bf16.mxu0 0
    %387 = vmatpush1.bf16.xpose.msra.mxu0 0
    %388 = vmatprep.subr.bf16.mxu0 0
    %389 = vmatpush1.bf16.xpose.msra.mxu0 0
    %390 = vmatprep.subr.bf16.mxu0 0
    %391 = vmatpush1.bf16.xpose.msra.mxu0 0
    %392 = vmatprep.subr.bf16.mxu0 0
    %393 = vmatpush1.bf16.xpose.msra.mxu0 0
    %394 = vmatprep.subr.bf16.mxu0 0
    %395 = vmatpush1.bf16.xpose.msra.mxu0 %v378
    %396 = vmatprep.subr.bf16.mxu0 0
    %397 = vmatpush2.bf16.xpose.msra.mxu0 0
    %398 = vmatprep.subr.bf16.mxu0 0
    %399 = vmatpush2.bf16.xpose.msra.mxu0 0
    %400 = vmatprep.subr.bf16.mxu0 0
    %401 = vmatpush2.bf16.xpose.msra.mxu0 0
    %402 = vmatprep.subr.bf16.mxu0 0
    %403 = vmatpush2.bf16.xpose.msra.mxu0 0
    %404 = vmatprep.subr.bf16.mxu0 0
    %405 = vmatpush2.bf16.xpose.msra.mxu0 0
    %406 = vmatprep.subr.bf16.mxu0 0
    %407 = vmatpush2.bf16.xpose.msra.mxu0 0
    %408 = vmatprep.subr.bf16.mxu0 0
    %409 = vmatpush2.bf16.xpose.msra.mxu0 0
    %410 = vmatprep.subr.bf16.mxu0 0
    %411 = vmatpush2.bf16.xpose.msra.mxu0 0
    %412 = vmatprep.mubr.bf16.mxu0 0
    %413 = vmatmul.mubr.bf16.gmra.mxu0 %v330
    %v414 = vpop.f32.mrf.mxu0
    %v415 = vadd.f32 %v91, %v414
    %v416 = vpop.f32.mrf.mxu0
    %v417 = vpop.f32.mrf.mxu0
    %v418 = vadd.f32 %v96, %v417
    %v419 = vpop.f32.mrf.mxu0
    %420 = vmatprep.mubr.bf16.mxu0 0
    %421 = vmatmul.mubr.bf16.gmra.mxu0 %v333
    %v422 = vpop.f32.mrf.mxu0
    %v423 = vadd.f32 %v101, %v422
    %v424 = vpop.f32.mrf.mxu0
    %v425 = vpop.f32.mrf.mxu0
    %v426 = vadd.f32 %v106, %v425
    %v427 = vpop.f32.mrf.mxu0
    %428 = vmatprep.mubr.bf16.mxu0 0
    %429 = vmatmul.mubr.bf16.gmra.mxu0 %v336
    %v430 = vpop.f32.mrf.mxu0
    %v431 = vadd.f32 %v111, %v430
    %v432 = vpop.f32.mrf.mxu0
    %v433 = vpop.f32.mrf.mxu0
    %v434 = vadd.f32 %v116, %v433
    %v435 = vpop.f32.mrf.mxu0
    %436 = vmatprep.mubr.bf16.mxu0 0
    %437 = vmatmul.mubr.bf16.gmra.mxu0 %v339
    %v438 = vpop.f32.mrf.mxu0
    %v439 = vadd.f32 %v121, %v438
    %v440 = vpop.f32.mrf.mxu0
    %v441 = vpop.f32.mrf.mxu0
    %v442 = vadd.f32 %v126, %v441
    %v443 = vpop.f32.mrf.mxu0
    %444 = vmatprep.mubr.bf16.mxu0 0
    %445 = vmatmul.mubr.bf16.gmra.mxu0 %v342
    %v446 = vpop.f32.mrf.mxu0
    %v447 = vadd.f32 %v131, %v446
    %v448 = vpop.f32.mrf.mxu0
    %v449 = vpop.f32.mrf.mxu0
    %v450 = vadd.f32 %v136, %v449
    %v451 = vpop.f32.mrf.mxu0
    %452 = vmatprep.mubr.bf16.mxu0 0
    %453 = vmatmul.mubr.bf16.gmra.mxu0 %v345
    %v454 = vpop.f32.mrf.mxu0
    %v455 = vadd.f32 %v141, %v454
    %v456 = vpop.f32.mrf.mxu0
    %v457 = vpop.f32.mrf.mxu0
    %v458 = vadd.f32 %v146, %v457
    %v459 = vpop.f32.mrf.mxu0
    %460 = vmatprep.mubr.bf16.mxu0 0
    %461 = vmatmul.mubr.bf16.gmra.mxu0 %v348
    %v462 = vpop.f32.mrf.mxu0
    %v463 = vadd.f32 %v151, %v462
    %v464 = vpop.f32.mrf.mxu0
    %v465 = vpop.f32.mrf.mxu0
    %v466 = vadd.f32 %v156, %v465
    %v467 = vpop.f32.mrf.mxu0
    %468 = vmatprep.mubr.bf16.mxu0 0
    %469 = vmatmul.mubr.bf16.gmra.mxu0 %v351
    %v470 = vpop.f32.mrf.mxu0
    %v471 = vadd.f32 %v161, %v470
    %v472 = vpop.f32.mrf.mxu0
    %v473 = vpop.f32.mrf.mxu0
    %v474 = vadd.f32 %v166, %v473
    %v475 = vpop.f32.mrf.mxu0
    %476 = vmatprep.mubr.bf16.mxu0 0
    %477 = vmatmul.mubr.bf16.gmra.mxu0 %v354
    %v478 = vpop.f32.mrf.mxu0
    %v479 = vadd.f32 %v171, %v478
    %v480 = vpop.f32.mrf.mxu0
    %v481 = vpop.f32.mrf.mxu0
    %v482 = vadd.f32 %v176, %v481
    %v483 = vpop.f32.mrf.mxu0
    %484 = vmatprep.mubr.bf16.mxu0 0
    %485 = vmatmul.mubr.bf16.gmra.mxu0 %v357
    %v486 = vpop.f32.mrf.mxu0
    %v487 = vadd.f32 %v181, %v486
    %v488 = vpop.f32.mrf.mxu0
    %v489 = vpop.f32.mrf.mxu0
    %v490 = vadd.f32 %v186, %v489
    %v491 = vpop.f32.mrf.mxu0
    %492 = vmatprep.mubr.bf16.mxu0 0
    %493 = vmatmul.mubr.bf16.gmra.mxu0 %v360
    %v494 = vpop.f32.mrf.mxu0
    %v495 = vadd.f32 %v191, %v494
    %v496 = vpop.f32.mrf.mxu0
    %v497 = vpop.f32.mrf.mxu0
    %v498 = vadd.f32 %v196, %v497
    %v499 = vpop.f32.mrf.mxu0
    %500 = vmatprep.mubr.bf16.mxu0 0
    %501 = vmatmul.mubr.bf16.gmra.mxu0 %v363
    %v502 = vpop.f32.mrf.mxu0
    %v503 = vadd.f32 %v201, %v502
    %v504 = vpop.f32.mrf.mxu0
    %v505 = vpop.f32.mrf.mxu0
    %v506 = vadd.f32 %v206, %v505
    %v507 = vpop.f32.mrf.mxu0
    %508 = vmatprep.mubr.bf16.mxu0 0
    %509 = vmatmul.mubr.bf16.gmra.mxu0 %v366
    %v510 = vpop.f32.mrf.mxu0
    %v511 = vadd.f32 %v211, %v510
    %v512 = vpop.f32.mrf.mxu0
    %v513 = vpop.f32.mrf.mxu0
    %v514 = vadd.f32 %v216, %v513
    %v515 = vpop.f32.mrf.mxu0
    %516 = vmatprep.mubr.bf16.mxu0 0
    %517 = vmatmul.mubr.bf16.gmra.mxu0 %v369
    %v518 = vpop.f32.mrf.mxu0
    %v519 = vadd.f32 %v221, %v518
    %v520 = vpop.f32.mrf.mxu0
    %v521 = vpop.f32.mrf.mxu0
    %v522 = vadd.f32 %v226, %v521
    %v523 = vpop.f32.mrf.mxu0
    %524 = vmatprep.mubr.bf16.mxu0 0
    %525 = vmatmul.mubr.bf16.gmra.mxu0 %v372
    %v526 = vpop.f32.mrf.mxu0
    %v527 = vadd.f32 %v231, %v526
    %v528 = vpop.f32.mrf.mxu0
    %v529 = vpop.f32.mrf.mxu0
    %v530 = vadd.f32 %v236, %v529
    %v531 = vpop.f32.mrf.mxu0
    %532 = vmatprep.mubr.bf16.mxu0 0
    %533 = vmatmul.mubr.bf16.gmra.mxu0 %v375
    %v534 = vpop.f32.mrf.mxu0
    %v535 = vadd.f32 %v241, %v534
    %v536 = vpop.f32.mrf.mxu0
    %v537 = vpop.f32.mrf.mxu0
    %v538 = vadd.f32 %v246, %v537
    %v539 = vpop.f32.mrf.mxu0
    %540 = vdwg.mxu0
    %v541 = vmax.f32 %v415, 0.0
    %v542 = vmax.f32 %v418, 0.0
    %v543 = vmax.f32 %v423, 0.0
    %v544 = vmax.f32 %v426, 0.0
    %v545 = vmax.f32 %v431, 0.0
    %v546 = vmax.f32 %v434, 0.0
    %v547 = vmax.f32 %v439, 0.0
    %v548 = vmax.f32 %v442, 0.0
    %v549 = vmax.f32 %v447, 0.0
    %v550 = vmax.f32 %v450, 0.0
    %v551 = vmax.f32 %v455, 0.0
    %v552 = vmax.f32 %v458, 0.0
    %v553 = vmax.f32 %v463, 0.0
    %v554 = vmax.f32 %v466, 0.0
    %v555 = vmax.f32 %v471, 0.0
    %v556 = vmax.f32 %v474, 0.0
    %v557 = vmax.f32 %v479, 0.0
    %v558 = vmax.f32 %v482, 0.0
    %v559 = vmax.f32 %v487, 0.0
    %v560 = vmax.f32 %v490, 0.0
    %v561 = vmax.f32 %v495, 0.0
    %v562 = vmax.f32 %v498, 0.0
    %v563 = vmax.f32 %v503, 0.0
    %v564 = vmax.f32 %v506, 0.0
    %v565 = vmax.f32 %v511, 0.0
    %v566 = vmax.f32 %v514, 0.0
    %v567 = vmax.f32 %v519, 0.0
    %v568 = vmax.f32 %v522, 0.0
    %v569 = vmax.f32 %v527, 0.0
    %v570 = vmax.f32 %v530, 0.0
    %v571 = vmax.f32 %v535, 0.0
    %v572 = vmax.f32 %v538, 0.0
    %v573 = vld [vmem:[%s3] sm:$0xff]
    %v574 = vld [vmem:[%s3 + $0x8] sm:$0xff]
    %v575 = vld [vmem:[%s3 + $0x10] sm:$0xff]
    %v576 = vld [vmem:[%s3 + $0x18] sm:$0xff]
    %v577 = vld [vmem:[%s3 + $0x20] sm:$0xff]
    %v578 = vld [vmem:[%s3 + $0x28] sm:$0xff]
    %v579 = vld [vmem:[%s3 + $0x30] sm:$0xff]
    %v580 = vld [vmem:[%s3 + $0x38] sm:$0xff]
    %v581 = vld [vmem:[%s3 + $0x40] sm:$0xff]
    %v582 = vld [vmem:[%s3 + $0x48] sm:$0xff]
    %v583 = vld [vmem:[%s3 + $0x50] sm:$0xff]
    %v584 = vld [vmem:[%s3 + $0x58] sm:$0xff]
    %v585 = vld [vmem:[%s3 + $0x60] sm:$0xff]
    %v586 = vld [vmem:[%s3 + $0x68] sm:$0xff]
    %v587 = vld [vmem:[%s3 + $0x70] sm:$0xff]
    %v588 = vld [vmem:[%s3 + $0x78] sm:$0xff]
    %v589 = vld [vmem:[%s3 + $0x80] sm:$0xff]
    %v590 = vld [vmem:[%s3 + $0x88] sm:$0xff]
    %v591 = vld [vmem:[%s3 + $0x90] sm:$0xff]
    %v592 = vld [vmem:[%s3 + $0x98] sm:$0xff]
    %v593 = vld [vmem:[%s3 + $0xa0] sm:$0xff]
    %v594 = vld [vmem:[%s3 + $0xa8] sm:$0xff]
    %v595 = vld [vmem:[%s3 + $0xb0] sm:$0xff]
    %v596 = vld [vmem:[%s3 + $0xb8] sm:$0xff]
    %v597 = vld [vmem:[%s3 + $0xc0] sm:$0xff]
    %v598 = vld [vmem:[%s3 + $0xc8] sm:$0xff]
    %v599 = vld [vmem:[%s3 + $0xd0] sm:$0xff]
    %v600 = vld [vmem:[%s3 + $0xd8] sm:$0xff]
    %v601 = vld [vmem:[%s3 + $0xe0] sm:$0xff]
    %v602 = vld [vmem:[%s3 + $0xe8] sm:$0xff]
    %v603 = vld [vmem:[%s3 + $0xf0] sm:$0xff]
    %v604 = vld [vmem:[%s3 + $0xf8] sm:$0xff]
    %606 = vset.pattern.permute.xlu0 0
    %607 = vperm.xlu0 %606, %v573
    %v608 = vpop.permute.xlu0 %607
    %611 = vset.pattern.permute.xlu0 0
    %612 = vperm.xlu0 %611, %v574
    %v613 = vpop.permute.xlu0 %612
    %616 = vset.pattern.permute.xlu0 0
    %617 = vperm.xlu0 %616, %v575
    %v618 = vpop.permute.xlu0 %617
    %621 = vset.pattern.permute.xlu0 0
    %622 = vperm.xlu0 %621, %v576
    %v623 = vpop.permute.xlu0 %622
    %626 = vset.pattern.permute.xlu0 0
    %627 = vperm.xlu0 %626, %v577
    %v628 = vpop.permute.xlu0 %627
    %631 = vset.pattern.permute.xlu0 0
    %632 = vperm.xlu0 %631, %v578
    %v633 = vpop.permute.xlu0 %632
    %636 = vset.pattern.permute.xlu0 0
    %637 = vperm.xlu0 %636, %v579
    %v638 = vpop.permute.xlu0 %637
    %641 = vset.pattern.permute.xlu0 0
    %642 = vperm.xlu0 %641, %v580
    %v643 = vpop.permute.xlu0 %642
    %646 = vset.pattern.permute.xlu0 0
    %647 = vperm.xlu0 %646, %v581
    %v648 = vpop.permute.xlu0 %647
    %651 = vset.pattern.permute.xlu0 0
    %652 = vperm.xlu0 %651, %v582
    %v653 = vpop.permute.xlu0 %652
    %656 = vset.pattern.permute.xlu0 0
    %657 = vperm.xlu0 %656, %v583
    %v658 = vpop.permute.xlu0 %657
    %661 = vset.pattern.permute.xlu0 0
    %662 = vperm.xlu0 %661, %v584
    %v663 = vpop.permute.xlu0 %662
    %666 = vset.pattern.permute.xlu0 0
    %667 = vperm.xlu0 %666, %v585
    %v668 = vpop.permute.xlu0 %667
    %671 = vset.pattern.permute.xlu0 0
    %672 = vperm.xlu0 %671, %v586
    %v673 = vpop.permute.xlu0 %672
    %676 = vset.pattern.permute.xlu0 0
    %677 = vperm.xlu0 %676, %v587
    %v678 = vpop.permute.xlu0 %677
    %681 = vset.pattern.permute.xlu0 0
    %682 = vperm.xlu0 %681, %v588
    %v683 = vpop.permute.xlu0 %682
    %686 = vset.pattern.permute.xlu0 0
    %687 = vperm.xlu0 %686, %v589
    %v688 = vpop.permute.xlu0 %687
    %691 = vset.pattern.permute.xlu0 0
    %692 = vperm.xlu0 %691, %v590
    %v693 = vpop.permute.xlu0 %692
    %696 = vset.pattern.permute.xlu0 0
    %697 = vperm.xlu0 %696, %v591
    %v698 = vpop.permute.xlu0 %697
    %701 = vset.pattern.permute.xlu0 0
    %702 = vperm.xlu0 %701, %v592
    %v703 = vpop.permute.xlu0 %702
    %706 = vset.pattern.permute.xlu0 0
    %707 = vperm.xlu0 %706, %v593
    %v708 = vpop.permute.xlu0 %707
    %711 = vset.pattern.permute.xlu0 0
    %712 = vperm.xlu0 %711, %v594
    %v713 = vpop.permute.xlu0 %712
    %716 = vset.pattern.permute.xlu0 0
    %717 = vperm.xlu0 %716, %v595
    %v718 = vpop.permute.xlu0 %717
    %721 = vset.pattern.permute.xlu0 0
    %722 = vperm.xlu0 %721, %v596
    %v723 = vpop.permute.xlu0 %722
    %726 = vset.pattern.permute.xlu0 0
    %727 = vperm.xlu0 %726, %v597
    %v728 = vpop.permute.xlu0 %727
    %731 = vset.pattern.permute.xlu0 0
    %732 = vperm.xlu0 %731, %v598
    %v733 = vpop.permute.xlu0 %732
    %736 = vset.pattern.permute.xlu0 0
    %737 = vperm.xlu0 %736, %v599
    %v738 = vpop.permute.xlu0 %737
    %741 = vset.pattern.permute.xlu0 0
    %742 = vperm.xlu0 %741, %v600
    %v743 = vpop.permute.xlu0 %742
    %746 = vset.pattern.permute.xlu0 0
    %747 = vperm.xlu0 %746, %v601
    %v748 = vpop.permute.xlu0 %747
    %751 = vset.pattern.permute.xlu0 0
    %752 = vperm.xlu0 %751, %v602
    %v753 = vpop.permute.xlu0 %752
    %756 = vset.pattern.permute.xlu0 0
    %757 = vperm.xlu0 %756, %v603
    %v758 = vpop.permute.xlu0 %757
    %761 = vset.pattern.permute.xlu0 0
    %762 = vperm.xlu0 %761, %v604
    %v763 = vpop.permute.xlu0 %762
    %v765 = vmul.f32 %v541, %v608
    %v766 = vmul.f32 %v542, %v613
    %v767 = vmul.f32 %v543, %v618
    %v768 = vmul.f32 %v544, %v623
    %v769 = vmul.f32 %v545, %v628
    %v770 = vmul.f32 %v546, %v633
    %v771 = vmul.f32 %v547, %v638
    %v772 = vmul.f32 %v548, %v643
    %v773 = vmul.f32 %v549, %v648
    %v774 = vmul.f32 %v550, %v653
    %v775 = vmul.f32 %v551, %v658
    %v776 = vmul.f32 %v552, %v663
    %v777 = vmul.f32 %v553, %v668
    %v778 = vmul.f32 %v554, %v673
    %v779 = vmul.f32 %v555, %v678
    %v780 = vmul.f32 %v556, %v683
    %v781 = vmul.f32 %v557, %v688
    %v782 = vmul.f32 %v558, %v693
    %v783 = vmul.f32 %v559, %v698
    %v784 = vmul.f32 %v560, %v703
    %v785 = vmul.f32 %v561, %v708
    %v786 = vmul.f32 %v562, %v713
    %v787 = vmul.f32 %v563, %v718
    %v788 = vmul.f32 %v564, %v723
    %v789 = vmul.f32 %v565, %v728
    %v790 = vmul.f32 %v566, %v733
    %v791 = vmul.f32 %v567, %v738
    %v792 = vmul.f32 %v568, %v743
    %v793 = vmul.f32 %v569, %v748
    %v794 = vmul.f32 %v570, %v753
    %v795 = vmul.f32 %v571, %v758
    %v796 = vmul.f32 %v572, %v763
    %vm797 = vcmask 64512
    %v798 = vsel %vm797, %v765, 0.0
    %v799 = vsel %vm797, %v766, 0.0
    %v800 = vadd.f32 %v798, %v799
    %v801 = vsel %vm797, %v767, 0.0
    %v802 = vadd.f32 %v800, %v801
    %v803 = vsel %vm797, %v768, 0.0
    %v804 = vadd.f32 %v802, %v803
    %v805 = vsel %vm797, %v769, 0.0
    %v806 = vadd.f32 %v804, %v805
    %v807 = vsel %vm797, %v770, 0.0
    %v808 = vadd.f32 %v806, %v807
    %v809 = vsel %vm797, %v771, 0.0
    %v810 = vadd.f32 %v808, %v809
    %v811 = vsel %vm797, %v772, 0.0
    %v812 = vadd.f32 %v810, %v811
    %v813 = vrot.slane %v812, 4
    %v814 = vadd.f32 %v812, %v813
    %v815 = vrot.slane %v814, 2
    %v816 = vadd.f32 %v814, %v815
    %v817 = vrot.slane %v816, 1
    %v818 = vadd.f32 %v816, %v817
    %v819 = vsel %vm797, %v773, 0.0
    %v820 = vsel %vm797, %v774, 0.0
    %v821 = vadd.f32 %v819, %v820
    %v822 = vsel %vm797, %v775, 0.0
    %v823 = vadd.f32 %v821, %v822
    %v824 = vsel %vm797, %v776, 0.0
    %v825 = vadd.f32 %v823, %v824
    %v826 = vsel %vm797, %v777, 0.0
    %v827 = vadd.f32 %v825, %v826
    %v828 = vsel %vm797, %v778, 0.0
    %v829 = vadd.f32 %v827, %v828
    %v830 = vsel %vm797, %v779, 0.0
    %v831 = vadd.f32 %v829, %v830
    %v832 = vsel %vm797, %v780, 0.0
    %v833 = vadd.f32 %v831, %v832
    %v834 = vrot.slane %v833, 4
    %v835 = vadd.f32 %v833, %v834
    %v836 = vrot.slane %v835, 2
    %v837 = vadd.f32 %v835, %v836
    %v838 = vrot.slane %v837, 1
    %v839 = vadd.f32 %v837, %v838
    %v840 = vsel %vm797, %v781, 0.0
    %v841 = vsel %vm797, %v782, 0.0
    %v842 = vadd.f32 %v840, %v841
    %v843 = vsel %vm797, %v783, 0.0
    %v844 = vadd.f32 %v842, %v843
    %v845 = vsel %vm797, %v784, 0.0
    %v846 = vadd.f32 %v844, %v845
    %v847 = vsel %vm797, %v785, 0.0
    %v848 = vadd.f32 %v846, %v847
    %v849 = vsel %vm797, %v786, 0.0
    %v850 = vadd.f32 %v848, %v849
    %v851 = vsel %vm797, %v787, 0.0
    %v852 = vadd.f32 %v850, %v851
    %v853 = vsel %vm797, %v788, 0.0
    %v854 = vadd.f32 %v852, %v853
    %v855 = vrot.slane %v854, 4
    %v856 = vadd.f32 %v854, %v855
    %v857 = vrot.slane %v856, 2
    %v858 = vadd.f32 %v856, %v857
    %v859 = vrot.slane %v858, 1
    %v860 = vadd.f32 %v858, %v859
    %v861 = vsel %vm797, %v789, 0.0
    %v862 = vsel %vm797, %v790, 0.0
    %v863 = vadd.f32 %v861, %v862
    %v864 = vsel %vm797, %v791, 0.0
    %v865 = vadd.f32 %v863, %v864
    %v866 = vsel %vm797, %v792, 0.0
    %v867 = vadd.f32 %v865, %v866
    %v868 = vsel %vm797, %v793, 0.0
    %v869 = vadd.f32 %v867, %v868
    %v870 = vsel %vm797, %v794, 0.0
    %v871 = vadd.f32 %v869, %v870
    %v872 = vsel %vm797, %v795, 0.0
    %v873 = vadd.f32 %v871, %v872
    %v874 = vsel %vm797, %v796, 0.0
    %v875 = vadd.f32 %v873, %v874
    %v876 = vrot.slane %v875, 4
    %v877 = vadd.f32 %v875, %v876
    %v878 = vrot.slane %v877, 2
    %v879 = vadd.f32 %v877, %v878
    %v880 = vrot.slane %v879, 1
    %v881 = vadd.f32 %v879, %v880
    %v882 = vld [vmem:[%s4] sm:$0xf]
    %884 = vset.pattern.permute.xlu0 0
    %885 = vperm.xlu0 %884, %v882
    %v886 = vpop.permute.xlu0 %885
    %v887 = vrot.slane %v886, 1
    %v888 = vrot.slane %v886, 2
    %v889 = vrot.slane %v886, 3
    %v894 = vadd.f32 %v818, %v886
    %v895 = vadd.f32 %v839, %v887
    %v896 = vadd.f32 %v860, %v888
    %v897 = vadd.f32 %v881, %v889
    %v902 = vrot.slane %v895, 7
    %vm903 = vcmask 1041409
    %v904 = vsel %vm903, %v902, %v894
    %v905 = vrot.slane %v896, 6
    %vm906 = vcmask 1042434
    %v907 = vsel %vm906, %v905, %v904
    %v908 = vrot.slane %v897, 5
    %vm909 = vcmask 1043459
    %v910 = vsel %vm909, %v908, %v907
    %vm912 = vcmask 60416
    %913 = vst.msk [vmem:[#allocation2] sm:$0xf] %vm912, %v910
    // Predicated region
    $region22: #{tpu_custom_call.1} parent=1 // pred_check
      _
    $region23: #{tpu_custom_call.1} parent=1 // pred_check_branch
      %915 = sbr.rel (0) target = $region25
    $region24: #{tpu_custom_call.1} parent=1 // pred_region
      %s917 = ssub.s32 64, 64
      %918 = vsyncadd [#allocation3], %s917
      %s920 = sshll.u32 [#allocation2], 4
      %s921 = int_to_ptr.vmem [resolvable:$true] %s920
      %923 = dma.vmem_to_hbm [thread:$0]  %s921, 64, %s5, [#allocation3]
    $region25: #{tpu_custom_call.1} parent=1 // pred_fallthru
      _
    // Predicated region
    $region26: #{tpu_custom_call.1} parent=1 // pred_check
      _
    $region27: #{tpu_custom_call.1} parent=1 // pred_check_branch
      %925 = sbr.rel (0) target = $region29
    $region28: #{tpu_custom_call.1} parent=1 // pred_region
      %926 = dma.done [#allocation3], 64
    $region29: #{tpu_custom_call.1} parent=1 // pred_fallthru
      _
    %927 = vsyncpa [#allocation3], 1

</llo_original>
